<compile_context>
chip_gen: v5e
topology: v5e:2x2
jax: 0.10.0
libtpu: 0.0.40
codegen_flags: <defaults>
</compile_context>

<pallas_src>
import functools
import math

import jax
import jax.numpy as jnp
from jax.experimental import pallas as pl
from jax.experimental.pallas import tpu as pltpu


def _attn_distill_kernel(s_ref, t_ref, o_ref):
    """One grid step: sum of per-row L2 norms of (teacher - student) for a row tile."""
    diff = t_ref[...].astype(jnp.float32) - s_ref[...].astype(jnp.float32)
    sq = jnp.sum(diff * diff, axis=-1, keepdims=True)   # (tile_rows, 1)
    o_ref[0, 0] = jnp.sum(jnp.sqrt(sq))                  # per-tile partial sum


def _round_up(x, m):
    return ((x + m - 1) // m) * m


def _pick_vmem_budget():
    """Per-input block byte budget + scoped VMEM limit, from physical VMEM size.

    v5e/v6e have 128 MiB VMEM per TensorCore, v7x only 64 MiB; size tiles so the
    double-buffered footprint (2 inputs x 2 buffers x block) stays safely inside.
    """
    try:
        cap = pltpu.get_tpu_info().vmem_capacity_bytes
    except Exception:
        cap = 64 * 1024 * 1024  # conservative (v7x-sized) fallback
    if cap >= 128 * 1024 * 1024:
        # v5e / v6e: 16 MiB blocks -> 64 MiB of double buffers, 96 MiB scoped limit.
        return 16 * 1024 * 1024, 96 * 1024 * 1024
    # v7x: 8 MiB blocks -> 32 MiB of double buffers, 48 MiB scoped limit.
    return 8 * 1024 * 1024, 48 * 1024 * 1024


@functools.partial(jax.jit, static_argnames=("reduction",))
def attention_distill_loss(student_attention_logits,
                           teacher_attention_logits,
                           reduction="mean"):
    """
    :param student_attention_logits: (B, L, H, S, S)
    :param teacher_attention_logits: (B, L, H, S, S)
    """
    assert student_attention_logits.shape == teacher_attention_logits.shape
    *lead, S = student_attention_logits.shape
    n_rows = math.prod(lead)

    s2d = student_attention_logits.reshape(n_rows, S)
    t2d = teacher_attention_logits.reshape(n_rows, S)
    itemsize = jnp.dtype(s2d.dtype).itemsize

    block_budget, vmem_limit = _pick_vmem_budget()

    # VMEM-budget-driven row tile (multiple of 8 sublanes), clamped to the data.
    tile_rows = max(8, (block_budget // (S * itemsize)) // 8 * 8)
    tile_rows = min(tile_rows, _round_up(n_rows, 8))
    grid_n = -(-n_rows // tile_rows)                      # cdiv
    # Re-balance to minimize zero padding while keeping the same grid size
    # (never grows beyond the budgeted tile).
    tile_rows = _round_up(-(-n_rows // grid_n), 8)
    padded_rows = grid_n * tile_rows

    if padded_rows != n_rows:
        pad = padded_rows - n_rows
        # Zero-padded rows give diff == 0 -> norm 0 -> contribute nothing.
        s2d = jnp.pad(s2d, ((0, pad), (0, 0)))
        t2d = jnp.pad(t2d, ((0, pad), (0, 0)))

    partials = pl.pallas_call(
        _attn_distill_kernel,
        out_shape=jax.ShapeDtypeStruct((grid_n, 1), jnp.float32),
        grid_spec=pltpu.PrefetchScalarGridSpec(
            num_scalar_prefetch=0,
            grid=(grid_n,),
            in_specs=[
                pl.BlockSpec((tile_rows, S), lambda i: (i, 0)),
                pl.BlockSpec((tile_rows, S), lambda i: (i, 0)),
            ],
            out_specs=pl.BlockSpec((1, 1), lambda i: (i, 0),
                                   memory_space=pltpu.SMEM),
        ),
        compiler_params=pltpu.CompilerParams(
            dimension_semantics=("parallel",),
            vmem_limit_bytes=vmem_limit,
        ),
    )(s2d, t2d)

    total = jnp.sum(partials)                             # f32 tree-sum of partials
    if reduction == "mean":
        return total / jnp.float32(n_rows)
    return total                                          # 'sum' (and anything else, like PyTorch's else-branch)


def _reference(student, teacher, reduction="mean"):
    d = jnp.sqrt(jnp.sum((teacher.astype(jnp.float32)
                          - student.astype(jnp.float32)) ** 2, axis=-1))
    return jnp.mean(d) if reduction == "mean" else jnp.sum(d)


if __name__ == "__main__":
    # Small shapes consistent with the module: (batsize, numlayers, numheads, seqlen, seqlen)
    B, L, H, S = 2, 2, 4, 8
    key = jax.random.PRNGKey(0)
    k1, k2 = jax.random.split(key)
    student = jax.random.normal(k1, (B, L, H, S, S), dtype=jnp.float32)
    teacher = jax.random.normal(k2, (B, L, H, S, S), dtype=jnp.float32)

    # mean reduction
    loss = attention_distill_loss(student, teacher, reduction="mean")
    jax.block_until_ready(loss)
    ref = _reference(student, teacher, "mean")
    assert jnp.allclose(loss, ref, rtol=1e-5, atol=1e-5), (loss, ref)

    # sum reduction
    loss_s = attention_distill_loss(student, teacher, reduction="sum")
    jax.block_until_ready(loss_s)
    ref_s = _reference(student, teacher, "sum")
    assert jnp.allclose(loss_s, ref_s, rtol=1e-5, atol=1e-5), (loss_s, ref_s)

    # awkward shape (row count not a multiple of 8) -> exercises the padding path
    k3, k4 = jax.random.split(k2)
    s_odd = jax.random.normal(k3, (1, 3, 5, 7, 9), dtype=jnp.float32)
    t_odd = jax.random.normal(k4, (1, 3, 5, 7, 9), dtype=jnp.float32)
    loss_o = attention_distill_loss(s_odd, t_odd, reduction="mean")
    jax.block_until_ready(loss_o)
    ref_o = _reference(s_odd, t_odd, "mean")
    assert jnp.allclose(loss_o, ref_o, rtol=1e-5, atol=1e-5), (loss_o, ref_o)

    # bf16 inputs streamed natively (kernel upcasts internally)
    loss_b = attention_distill_loss(student.astype(jnp.bfloat16),
                                    teacher.astype(jnp.bfloat16),
                                    reduction="mean")
    jax.block_until_ready(loss_b)
    ref_b = _reference(student.astype(jnp.bfloat16),
                       teacher.astype(jnp.bfloat16), "mean")
    assert jnp.allclose(loss_b, ref_b, rtol=1e-5, atol=1e-5), (loss_b, ref_b)

    print("KERNEL_OK")
</pallas_src>

<mosaic_0001>
module attributes {stable_mosaic.version = 11 : i64} {
  func.func @_attn_distill_kernel(%arg0: i32, %arg1: memref<128x8xf32, #tpu.memory_space<vmem>>, %arg2: memref<128x8xf32, #tpu.memory_space<vmem>>, %arg3: memref<1x1xf32, #tpu.memory_space<smem>>) attributes {dimension_semantics = [#tpu.dimension_semantics<parallel>], iteration_bounds = array<i64: 1>, scalar_prefetch = 0 : i64, scratch_operands = 0 : i64, tpu.core_type = #tpu.core_type<tc>, window_params = [{transform_indices = @transform_0, window_bounds = array<i64: 128, 8>}, {transform_indices = @transform_1, window_bounds = array<i64: 128, 8>}, {transform_indices = @transform_2, window_bounds = array<i64: 1, 1>}]} {
    %c0 = arith.constant 0 : index
    %c0_0 = arith.constant 0 : index
    %0 = vector.load %arg2[%c0, %c0_0] : memref<128x8xf32, #tpu.memory_space<vmem>>, vector<128x8xf32>
    %c0_1 = arith.constant 0 : index
    %c0_2 = arith.constant 0 : index
    %1 = vector.load %arg1[%c0_1, %c0_2] : memref<128x8xf32, #tpu.memory_space<vmem>>, vector<128x8xf32>
    %2 = arith.subf %0, %1 : vector<128x8xf32>
    %3 = arith.mulf %2, %2 : vector<128x8xf32>
    %cst = arith.constant dense<0.000000e+00> : vector<128xf32>
    %4 = vector.multi_reduction <add>, %3, %cst [1] : vector<128x8xf32> to vector<128xf32>
    %5 = vector.shape_cast %4 : vector<128xf32> to vector<128x1xf32>
    %6 = math.sqrt %5 : vector<128x1xf32>
    %7 = vector.shape_cast %6 : vector<128x1xf32> to vector<1x128x1xf32>
    %cst_3 = arith.constant dense<0.000000e+00> : vector<1xf32>
    %8 = vector.multi_reduction <add>, %7, %cst_3 [1, 2] : vector<1x128x1xf32> to vector<1xf32>
    %9 = vector.shape_cast %8 : vector<1xf32> to vector<1x1x1xf32>
    %10 = vector.extract %9[0, 0, 0] : f32 from vector<1x1x1xf32>
    %c0_4 = arith.constant 0 : index
    %c0_5 = arith.constant 0 : index
    %11 = memref.load %arg3[%c0_4, %c0_5] : memref<1x1xf32, #tpu.memory_space<smem>>
    memref.store %10, %arg3[%c0_4, %c0_5] : memref<1x1xf32, #tpu.memory_space<smem>>
    return
  }
  func.func @transform_0(%arg0: i32) -> (i32, i32) {
    %c0_i32 = arith.constant 0 : i32
    %c0_i32_0 = arith.constant 0 : i32
    return %arg0, %c0_i32 : i32, i32
  }
  func.func @transform_1(%arg0: i32) -> (i32, i32) {
    %c0_i32 = arith.constant 0 : i32
    %c0_i32_0 = arith.constant 0 : i32
    return %arg0, %c0_i32 : i32, i32
  }
  func.func @transform_2(%arg0: i32) -> (i32, i32) {
    %c0_i32 = arith.constant 0 : i32
    %c0_i32_0 = arith.constant 0 : i32
    return %arg0, %c0_i32 : i32, i32
  }
}

</mosaic_0001>

<llo_original>
// kernel: attention_distill_loss.1
$region0: #{attention_distill_loss.1}
  #allocation0 [shape = 'u32[]', space=smem, size = 0x4, offset = 0x4, fixed_abs, tag = 'smem constant byte address 0x4 - core index']
  #allocation1 [shape = 'u32[72,128]{1,0:T(1,128)}', space=vmem, size = 0x9000, scoped, tag = 'internal scratch']
  %s0 = inlined_call_operand.hbm [shape: f32[128,8], index: 0, kind: input, shape index: {}]
  %s1 = inlined_call_operand.hbm [shape: f32[128,8], index: 1, kind: input, shape index: {}]
  %s2 = inlined_call_operand.hbm [shape: f32[1,1], index: 2, kind: output, shape index: {}]
  %s3 = sld [smem:[#allocation0]]
  $region26: #{attention_distill_loss.1} parent=0
    _
  %s5 = ssub.s32 1, %s3
  %s6 = scalar_select 0, %s5, %s3
  $region1: #{attention_distill_loss.1} parent=0
    #allocation2 [shape = 'u8[65536]{0}', space=vmem, size = 0x10000, scoped, tag = 'input window, operand 0, single buffered']
    #allocation3 [shape = 's32[1]{0}', space=sflag, size = 0x4, scoped, tag = 'scoped memory for attention_distill_loss.1']
    #allocation4 [shape = 's32[1]{0}', space=sflag, size = 0x4, scoped, tag = 'scoped memory for attention_distill_loss.1']
    #allocation5 [shape = 'u8[65536]{0}', space=vmem, size = 0x10000, scoped, tag = 'input window, operand 1, single buffered']
    #allocation6 [shape = 's32[1]{0}', space=sflag, size = 0x4, scoped, tag = 'scoped memory for attention_distill_loss.1']
    #allocation7 [shape = 'u8[512]{0}', space=smem, size = 0x200, scoped, tag = 'output window, operand 0, single buffered']
    %7 = vsyncpa [#allocation3], 0
    %8 = vsyncpa [#allocation6], 0
    %9 = vsyncpa [#allocation4], 0
    // Predicated region
    $region2: #{attention_distill_loss.1} parent=1 // pred_check
      _
    $region3: #{attention_distill_loss.1} parent=1 // pred_check_branch
      %11 = sbr.rel (0) target = $region5
    $region4: #{attention_distill_loss.1} parent=1 // pred_region
      %13 = vsyncadd [#allocation3], 0
      %s14 = sshll.u32 %s0, 4
      %s15 = int_to_ptr.hbm [resolvable:$true] %s14
      %s16 = sshll.u32 [#allocation2], 4
      %s17 = int_to_ptr.vmem [resolvable:$true] %s16
      %22 = dma.hbm_to_vmem [thread:$0]  %s15, 2048, %s17, [#allocation3], 128, 128, 8
    $region5: #{attention_distill_loss.1} parent=1 // pred_fallthru
      _
    // Predicated region
    $region6: #{attention_distill_loss.1} parent=1 // pred_check
      _
    $region7: #{attention_distill_loss.1} parent=1 // pred_check_branch
      %24 = sbr.rel (0) target = $region9
    $region8: #{attention_distill_loss.1} parent=1 // pred_region
      %26 = vsyncadd [#allocation6], 0
      %s27 = sshll.u32 %s1, 4
      %s28 = int_to_ptr.hbm [resolvable:$true] %s27
      %s29 = sshll.u32 [#allocation5], 4
      %s30 = int_to_ptr.vmem [resolvable:$true] %s29
      %35 = dma.hbm_to_vmem [thread:$0]  %s28, 2048, %s30, [#allocation6], 128, 128, 8
    $region9: #{attention_distill_loss.1} parent=1 // pred_fallthru
      _
    // Predicated region
    $region10: #{attention_distill_loss.1} parent=1 // pred_check
      _
    $region11: #{attention_distill_loss.1} parent=1 // pred_check_branch
      %37 = sbr.rel (0) target = $region13
    $region12: #{attention_distill_loss.1} parent=1 // pred_region
      %39 = dma.done [#allocation3], 2048
    $region13: #{attention_distill_loss.1} parent=1 // pred_fallthru
      _
    // Predicated region
    $region14: #{attention_distill_loss.1} parent=1 // pred_check
      _
    $region15: #{attention_distill_loss.1} parent=1 // pred_check_branch
      %41 = sbr.rel (0) target = $region17
    $region16: #{attention_distill_loss.1} parent=1 // pred_region
      %43 = dma.done [#allocation6], 2048
    $region17: #{attention_distill_loss.1} parent=1 // pred_fallthru
      _
    %v44 = vld [vmem:[#allocation5] sm:$0xff]
    %v45 = vld [vmem:[#allocation5 + $0x8] sm:$0xff]
    %v46 = vld [vmem:[#allocation5 + $0x10] sm:$0xff]
    %v47 = vld [vmem:[#allocation5 + $0x18] sm:$0xff]
    %v48 = vld [vmem:[#allocation5 + $0x20] sm:$0xff]
    %v49 = vld [vmem:[#allocation5 + $0x28] sm:$0xff]
    %v50 = vld [vmem:[#allocation5 + $0x30] sm:$0xff]
    %v51 = vld [vmem:[#allocation5 + $0x38] sm:$0xff]
    %v52 = vld [vmem:[#allocation5 + $0x40] sm:$0xff]
    %v53 = vld [vmem:[#allocation5 + $0x48] sm:$0xff]
    %v54 = vld [vmem:[#allocation5 + $0x50] sm:$0xff]
    %v55 = vld [vmem:[#allocation5 + $0x58] sm:$0xff]
    %v56 = vld [vmem:[#allocation5 + $0x60] sm:$0xff]
    %v57 = vld [vmem:[#allocation5 + $0x68] sm:$0xff]
    %v58 = vld [vmem:[#allocation5 + $0x70] sm:$0xff]
    %v59 = vld [vmem:[#allocation5 + $0x78] sm:$0xff]
    %v60 = vld [vmem:[#allocation2] sm:$0xff]
    %v61 = vld [vmem:[#allocation2 + $0x8] sm:$0xff]
    %v62 = vld [vmem:[#allocation2 + $0x10] sm:$0xff]
    %v63 = vld [vmem:[#allocation2 + $0x18] sm:$0xff]
    %v64 = vld [vmem:[#allocation2 + $0x20] sm:$0xff]
    %v65 = vld [vmem:[#allocation2 + $0x28] sm:$0xff]
    %v66 = vld [vmem:[#allocation2 + $0x30] sm:$0xff]
    %v67 = vld [vmem:[#allocation2 + $0x38] sm:$0xff]
    %v68 = vld [vmem:[#allocation2 + $0x40] sm:$0xff]
    %v69 = vld [vmem:[#allocation2 + $0x48] sm:$0xff]
    %v70 = vld [vmem:[#allocation2 + $0x50] sm:$0xff]
    %v71 = vld [vmem:[#allocation2 + $0x58] sm:$0xff]
    %v72 = vld [vmem:[#allocation2 + $0x60] sm:$0xff]
    %v73 = vld [vmem:[#allocation2 + $0x68] sm:$0xff]
    %v74 = vld [vmem:[#allocation2 + $0x70] sm:$0xff]
    %v75 = vld [vmem:[#allocation2 + $0x78] sm:$0xff]
    %v76 = vsub.f32 %v44, %v60
    %v77 = vsub.f32 %v45, %v61
    %v78 = vsub.f32 %v46, %v62
    %v79 = vsub.f32 %v47, %v63
    %v80 = vsub.f32 %v48, %v64
    %v81 = vsub.f32 %v49, %v65
    %v82 = vsub.f32 %v50, %v66
    %v83 = vsub.f32 %v51, %v67
    %v84 = vsub.f32 %v52, %v68
    %v85 = vsub.f32 %v53, %v69
    %v86 = vsub.f32 %v54, %v70
    %v87 = vsub.f32 %v55, %v71
    %v88 = vsub.f32 %v56, %v72
    %v89 = vsub.f32 %v57, %v73
    %v90 = vsub.f32 %v58, %v74
    %v91 = vsub.f32 %v59, %v75
    %v92 = vmul.f32 %v76, %v76
    %v93 = vmul.f32 %v77, %v77
    %v94 = vmul.f32 %v78, %v78
    %v95 = vmul.f32 %v79, %v79
    %v96 = vmul.f32 %v80, %v80
    %v97 = vmul.f32 %v81, %v81
    %v98 = vmul.f32 %v82, %v82
    %v99 = vmul.f32 %v83, %v83
    %v100 = vmul.f32 %v84, %v84
    %v101 = vmul.f32 %v85, %v85
    %v102 = vmul.f32 %v86, %v86
    %v103 = vmul.f32 %v87, %v87
    %v104 = vmul.f32 %v88, %v88
    %v105 = vmul.f32 %v89, %v89
    %v106 = vmul.f32 %v90, %v90
    %v107 = vmul.f32 %v91, %v91
    %vm108 = vcmask 64512
    %v109 = vsel %vm108, %v92, 0.0
    %110 = vadd.xlane.f32.xlu0 %v109
    %v111 = vpop.xlane.xlu0 %110
    %v112 = vsel %vm108, %v93, 0.0
    %113 = vadd.xlane.f32.xlu0 %v112
    %v114 = vpop.xlane.xlu0 %113
    %v115 = vsel %vm108, %v94, 0.0
    %116 = vadd.xlane.f32.xlu0 %v115
    %v117 = vpop.xlane.xlu0 %116
    %v118 = vsel %vm108, %v95, 0.0
    %119 = vadd.xlane.f32.xlu0 %v118
    %v120 = vpop.xlane.xlu0 %119
    %v121 = vsel %vm108, %v96, 0.0
    %122 = vadd.xlane.f32.xlu0 %v121
    %v123 = vpop.xlane.xlu0 %122
    %v124 = vsel %vm108, %v97, 0.0
    %125 = vadd.xlane.f32.xlu0 %v124
    %v126 = vpop.xlane.xlu0 %125
    %v127 = vsel %vm108, %v98, 0.0
    %128 = vadd.xlane.f32.xlu0 %v127
    %v129 = vpop.xlane.xlu0 %128
    %v130 = vsel %vm108, %v99, 0.0
    %131 = vadd.xlane.f32.xlu0 %v130
    %v132 = vpop.xlane.xlu0 %131
    %v133 = vsel %vm108, %v100, 0.0
    %134 = vadd.xlane.f32.xlu0 %v133
    %v135 = vpop.xlane.xlu0 %134
    %v136 = vsel %vm108, %v101, 0.0
    %137 = vadd.xlane.f32.xlu0 %v136
    %v138 = vpop.xlane.xlu0 %137
    %v139 = vsel %vm108, %v102, 0.0
    %140 = vadd.xlane.f32.xlu0 %v139
    %v141 = vpop.xlane.xlu0 %140
    %v142 = vsel %vm108, %v103, 0.0
    %143 = vadd.xlane.f32.xlu0 %v142
    %v144 = vpop.xlane.xlu0 %143
    %v145 = vsel %vm108, %v104, 0.0
    %146 = vadd.xlane.f32.xlu0 %v145
    %v147 = vpop.xlane.xlu0 %146
    %v148 = vsel %vm108, %v105, 0.0
    %149 = vadd.xlane.f32.xlu0 %v148
    %v150 = vpop.xlane.xlu0 %149
    %v151 = vsel %vm108, %v106, 0.0
    %152 = vadd.xlane.f32.xlu0 %v151
    %v153 = vpop.xlane.xlu0 %152
    %v154 = vsel %vm108, %v107, 0.0
    %155 = vadd.xlane.f32.xlu0 %v154
    %v156 = vpop.xlane.xlu0 %155
    %v157 = vrsqrt.pop %v111
    %v158 = vmul.f32 %v157, %v111
    %v159 = vmul.f32 %v158, %v157
    %v160 = vmul.f32 0.5, %v159
    %v161 = vsub.f32 1.5, %v160
    %v162 = vmul.f32 %v157, %v161
    %v163 = vmul.f32 %v111, %v162
    %vm164 = vcmp.eq.f32.partialorder %v111, inf
    %v165 = vsel %vm164, %v111, %v163
    %vm166 = vcmp.eq.f32.partialorder %v111, 0.0
    %v167 = vand.u32 %v111, 2147483648
    %v168 = vsel %vm166, %v167, %v165
    %v169 = vrsqrt.pop %v114
    %v170 = vmul.f32 %v169, %v114
    %v171 = vmul.f32 %v170, %v169
    %v172 = vmul.f32 0.5, %v171
    %v173 = vsub.f32 1.5, %v172
    %v174 = vmul.f32 %v169, %v173
    %v175 = vmul.f32 %v114, %v174
    %vm176 = vcmp.eq.f32.partialorder %v114, inf
    %v177 = vsel %vm176, %v114, %v175
    %vm178 = vcmp.eq.f32.partialorder %v114, 0.0
    %v179 = vand.u32 %v114, 2147483648
    %v180 = vsel %vm178, %v179, %v177
    %v181 = vrsqrt.pop %v117
    %v182 = vmul.f32 %v181, %v117
    %v183 = vmul.f32 %v182, %v181
    %v184 = vmul.f32 0.5, %v183
    %v185 = vsub.f32 1.5, %v184
    %v186 = vmul.f32 %v181, %v185
    %v187 = vmul.f32 %v117, %v186
    %vm188 = vcmp.eq.f32.partialorder %v117, inf
    %v189 = vsel %vm188, %v117, %v187
    %vm190 = vcmp.eq.f32.partialorder %v117, 0.0
    %v191 = vand.u32 %v117, 2147483648
    %v192 = vsel %vm190, %v191, %v189
    %v193 = vrsqrt.pop %v120
    %v194 = vmul.f32 %v193, %v120
    %v195 = vmul.f32 %v194, %v193
    %v196 = vmul.f32 0.5, %v195
    %v197 = vsub.f32 1.5, %v196
    %v198 = vmul.f32 %v193, %v197
    %v199 = vmul.f32 %v120, %v198
    %vm200 = vcmp.eq.f32.partialorder %v120, inf
    %v201 = vsel %vm200, %v120, %v199
    %vm202 = vcmp.eq.f32.partialorder %v120, 0.0
    %v203 = vand.u32 %v120, 2147483648
    %v204 = vsel %vm202, %v203, %v201
    %v205 = vrsqrt.pop %v123
    %v206 = vmul.f32 %v205, %v123
    %v207 = vmul.f32 %v206, %v205
    %v208 = vmul.f32 0.5, %v207
    %v209 = vsub.f32 1.5, %v208
    %v210 = vmul.f32 %v205, %v209
    %v211 = vmul.f32 %v123, %v210
    %vm212 = vcmp.eq.f32.partialorder %v123, inf
    %v213 = vsel %vm212, %v123, %v211
    %vm214 = vcmp.eq.f32.partialorder %v123, 0.0
    %v215 = vand.u32 %v123, 2147483648
    %v216 = vsel %vm214, %v215, %v213
    %v217 = vrsqrt.pop %v126
    %v218 = vmul.f32 %v217, %v126
    %v219 = vmul.f32 %v218, %v217
    %v220 = vmul.f32 0.5, %v219
    %v221 = vsub.f32 1.5, %v220
    %v222 = vmul.f32 %v217, %v221
    %v223 = vmul.f32 %v126, %v222
    %vm224 = vcmp.eq.f32.partialorder %v126, inf
    %v225 = vsel %vm224, %v126, %v223
    %vm226 = vcmp.eq.f32.partialorder %v126, 0.0
    %v227 = vand.u32 %v126, 2147483648
    %v228 = vsel %vm226, %v227, %v225
    %v229 = vrsqrt.pop %v129
    %v230 = vmul.f32 %v229, %v129
    %v231 = vmul.f32 %v230, %v229
    %v232 = vmul.f32 0.5, %v231
    %v233 = vsub.f32 1.5, %v232
    %v234 = vmul.f32 %v229, %v233
    %v235 = vmul.f32 %v129, %v234
    %vm236 = vcmp.eq.f32.partialorder %v129, inf
    %v237 = vsel %vm236, %v129, %v235
    %vm238 = vcmp.eq.f32.partialorder %v129, 0.0
    %v239 = vand.u32 %v129, 2147483648
    %v240 = vsel %vm238, %v239, %v237
    %v241 = vrsqrt.pop %v132
    %v242 = vmul.f32 %v241, %v132
    %v243 = vmul.f32 %v242, %v241
    %v244 = vmul.f32 0.5, %v243
    %v245 = vsub.f32 1.5, %v244
    %v246 = vmul.f32 %v241, %v245
    %v247 = vmul.f32 %v132, %v246
    %vm248 = vcmp.eq.f32.partialorder %v132, inf
    %v249 = vsel %vm248, %v132, %v247
    %vm250 = vcmp.eq.f32.partialorder %v132, 0.0
    %v251 = vand.u32 %v132, 2147483648
    %v252 = vsel %vm250, %v251, %v249
    %v253 = vrsqrt.pop %v135
    %v254 = vmul.f32 %v253, %v135
    %v255 = vmul.f32 %v254, %v253
    %v256 = vmul.f32 0.5, %v255
    %v257 = vsub.f32 1.5, %v256
    %v258 = vmul.f32 %v253, %v257
    %v259 = vmul.f32 %v135, %v258
    %vm260 = vcmp.eq.f32.partialorder %v135, inf
    %v261 = vsel %vm260, %v135, %v259
    %vm262 = vcmp.eq.f32.partialorder %v135, 0.0
    %v263 = vand.u32 %v135, 2147483648
    %v264 = vsel %vm262, %v263, %v261
    %v265 = vrsqrt.pop %v138
    %v266 = vmul.f32 %v265, %v138
    %v267 = vmul.f32 %v266, %v265
    %v268 = vmul.f32 0.5, %v267
    %v269 = vsub.f32 1.5, %v268
    %v270 = vmul.f32 %v265, %v269
    %v271 = vmul.f32 %v138, %v270
    %vm272 = vcmp.eq.f32.partialorder %v138, inf
    %v273 = vsel %vm272, %v138, %v271
    %vm274 = vcmp.eq.f32.partialorder %v138, 0.0
    %v275 = vand.u32 %v138, 2147483648
    %v276 = vsel %vm274, %v275, %v273
    %v277 = vrsqrt.pop %v141
    %v278 = vmul.f32 %v277, %v141
    %v279 = vmul.f32 %v278, %v277
    %v280 = vmul.f32 0.5, %v279
    %v281 = vsub.f32 1.5, %v280
    %v282 = vmul.f32 %v277, %v281
    %v283 = vmul.f32 %v141, %v282
    %vm284 = vcmp.eq.f32.partialorder %v141, inf
    %v285 = vsel %vm284, %v141, %v283
    %vm286 = vcmp.eq.f32.partialorder %v141, 0.0
    %v287 = vand.u32 %v141, 2147483648
    %v288 = vsel %vm286, %v287, %v285
    %v289 = vrsqrt.pop %v144
    %v290 = vmul.f32 %v289, %v144
    %v291 = vmul.f32 %v290, %v289
    %v292 = vmul.f32 0.5, %v291
    %v293 = vsub.f32 1.5, %v292
    %v294 = vmul.f32 %v289, %v293
    %v295 = vmul.f32 %v144, %v294
    %vm296 = vcmp.eq.f32.partialorder %v144, inf
    %v297 = vsel %vm296, %v144, %v295
    %vm298 = vcmp.eq.f32.partialorder %v144, 0.0
    %v299 = vand.u32 %v144, 2147483648
    %v300 = vsel %vm298, %v299, %v297
    %v301 = vrsqrt.pop %v147
    %v302 = vmul.f32 %v301, %v147
    %v303 = vmul.f32 %v302, %v301
    %v304 = vmul.f32 0.5, %v303
    %v305 = vsub.f32 1.5, %v304
    %v306 = vmul.f32 %v301, %v305
    %v307 = vmul.f32 %v147, %v306
    %vm308 = vcmp.eq.f32.partialorder %v147, inf
    %v309 = vsel %vm308, %v147, %v307
    %vm310 = vcmp.eq.f32.partialorder %v147, 0.0
    %v311 = vand.u32 %v147, 2147483648
    %v312 = vsel %vm310, %v311, %v309
    %v313 = vrsqrt.pop %v150
    %v314 = vmul.f32 %v313, %v150
    %v315 = vmul.f32 %v314, %v313
    %v316 = vmul.f32 0.5, %v315
    %v317 = vsub.f32 1.5, %v316
    %v318 = vmul.f32 %v313, %v317
    %v319 = vmul.f32 %v150, %v318
    %vm320 = vcmp.eq.f32.partialorder %v150, inf
    %v321 = vsel %vm320, %v150, %v319
    %vm322 = vcmp.eq.f32.partialorder %v150, 0.0
    %v323 = vand.u32 %v150, 2147483648
    %v324 = vsel %vm322, %v323, %v321
    %v325 = vrsqrt.pop %v153
    %v326 = vmul.f32 %v325, %v153
    %v327 = vmul.f32 %v326, %v325
    %v328 = vmul.f32 0.5, %v327
    %v329 = vsub.f32 1.5, %v328
    %v330 = vmul.f32 %v325, %v329
    %v331 = vmul.f32 %v153, %v330
    %vm332 = vcmp.eq.f32.partialorder %v153, inf
    %v333 = vsel %vm332, %v153, %v331
    %vm334 = vcmp.eq.f32.partialorder %v153, 0.0
    %v335 = vand.u32 %v153, 2147483648
    %v336 = vsel %vm334, %v335, %v333
    %v337 = vrsqrt.pop %v156
    %v338 = vmul.f32 %v337, %v156
    %v339 = vmul.f32 %v338, %v337
    %v340 = vmul.f32 0.5, %v339
    %v341 = vsub.f32 1.5, %v340
    %v342 = vmul.f32 %v337, %v341
    %v343 = vmul.f32 %v156, %v342
    %vm344 = vcmp.eq.f32.partialorder %v156, inf
    %v345 = vsel %vm344, %v156, %v343
    %vm346 = vcmp.eq.f32.partialorder %v156, 0.0
    %v347 = vand.u32 %v156, 2147483648
    %v348 = vsel %vm346, %v347, %v345
    %vm349 = vcmask 7168
    %v350 = vsel %vm349, %v168, 0.0
    %v351 = vsel %vm349, %v180, 0.0
    %v352 = vadd.f32 %v350, %v351
    %v353 = vsel %vm349, %v192, 0.0
    %v354 = vadd.f32 %v352, %v353
    %v355 = vsel %vm349, %v204, 0.0
    %v356 = vadd.f32 %v354, %v355
    %v357 = vsel %vm349, %v216, 0.0
    %v358 = vadd.f32 %v356, %v357
    %v359 = vsel %vm349, %v228, 0.0
    %v360 = vadd.f32 %v358, %v359
    %v361 = vsel %vm349, %v240, 0.0
    %v362 = vadd.f32 %v360, %v361
    %v363 = vsel %vm349, %v252, 0.0
    %v364 = vadd.f32 %v362, %v363
    %v365 = vsel %vm349, %v264, 0.0
    %v366 = vadd.f32 %v364, %v365
    %v367 = vsel %vm349, %v276, 0.0
    %v368 = vadd.f32 %v366, %v367
    %v369 = vsel %vm349, %v288, 0.0
    %v370 = vadd.f32 %v368, %v369
    %v371 = vsel %vm349, %v300, 0.0
    %v372 = vadd.f32 %v370, %v371
    %v373 = vsel %vm349, %v312, 0.0
    %v374 = vadd.f32 %v372, %v373
    %v375 = vsel %vm349, %v324, 0.0
    %v376 = vadd.f32 %v374, %v375
    %v377 = vsel %vm349, %v336, 0.0
    %v378 = vadd.f32 %v376, %v377
    %v379 = vsel %vm349, %v348, 0.0
    %v380 = vadd.f32 %v378, %v379
    %381 = vadd.xlane.f32.xlu0 %v380
    %v382 = vpop.xlane.xlu0 %381
    %v383 = vrot.slane %v382, 4
    %v384 = vadd.f32 %v382, %v383
    %v385 = vrot.slane %v384, 2
    %v386 = vadd.f32 %v384, %v385
    %v387 = vrot.slane %v386, 1
    %v388 = vadd.f32 %v386, %v387
    %s389 = vtos %v388
    %s390 = scalar_lea.smem [#allocation7], 0
    %391 = sst [smem:[%s390]] %s389
    // Predicated region
    $region18: #{attention_distill_loss.1} parent=1 // pred_check
      _
    $region19: #{attention_distill_loss.1} parent=1 // pred_check_branch
      %393 = sbr.rel (0) target = $region21
    $region20: #{attention_distill_loss.1} parent=1 // pred_region
      %395 = vsyncadd [#allocation4], 0
      %s397 = sshll.u32 %s2, 4
      %s398 = int_to_ptr.hbm [resolvable:$true] %s397
      %400 = dma.smem_to_hbm [#allocation7], 16, %s398, [#allocation4]
    $region21: #{attention_distill_loss.1} parent=1 // pred_fallthru
      _
    // Predicated region
    $region22: #{attention_distill_loss.1} parent=1 // pred_check
      _
    $region23: #{attention_distill_loss.1} parent=1 // pred_check_branch
      %402 = sbr.rel (0) target = $region25
    $region24: #{attention_distill_loss.1} parent=1 // pred_region
      %404 = dma.done [#allocation4], 16
    $region25: #{attention_distill_loss.1} parent=1 // pred_fallthru
      _
    %405 = sfence
    %406 = vsyncpa [#allocation3], 1
    %407 = vsyncpa [#allocation6], 1
    %408 = vsyncpa [#allocation4], 1

</llo_original>
